<compile_context>
chip_gen: v7x
topology: tpu7x:2x2x1
jax: 0.10.0
libtpu: 0.0.40
codegen_flags: <defaults>
</compile_context>

<pallas_src>
import jax
import jax.numpy as jnp
from jax.experimental import pallas as pl
from jax.experimental.pallas import tpu as pltpu


def _round_up(x: int, m: int) -> int:
    return ((x + m - 1) // m) * m


def _largest_tile(dim_pad: int, unit: int, cap: int) -> int:
    """Largest multiple of `unit` that divides `dim_pad` and is <= cap (>= unit)."""
    best = unit
    t = unit
    limit = min(dim_pad, cap)
    while t <= limit:
        if dim_pad % t == 0:
            best = t
        t += unit
    return best


def _choose_tiles(M: int, K_pad: int, T_pad: int):
    # --- M tile: whole M in one tile when it fits (weight streams once). ---
    m8 = _round_up(M, 8)
    if m8 <= 512:
        TM = m8
    else:
        best = None
        for cand in (512, 384, 256, 192, 128, 64):
            waste = _round_up(M, cand) - M
            key = (waste, -cand)          # minimize padding waste, ties -> bigger tile
            if best is None or key < best[0]:
                best = (key, cand)
        TM = best[1]
    M_pad = _round_up(M, TM)

    # --- K tile: single K step whenever nf fits the 2048 cap. --------------
    TK = _largest_tile(K_pad, 128, 2048)
    # --- N tile. ------------------------------------------------------------
    TN = _largest_tile(T_pad, 128, 512)

    # v7x shards the "parallel" grid axes over 2 TensorCores; avoid a
    # degenerate 1x1 parallel grid when the shapes allow a split.
    if (M_pad // TM) * (T_pad // TN) == 1:
        if T_pad >= 256:
            TN = _largest_tile(T_pad, 128, T_pad // 2)
        elif M_pad >= 16 and M_pad % 16 == 0:
            TM = M_pad // 2

    return TM, TN, TK, M_pad


def _flatten_head_kernel_single_k(x_ref, w_ref, b_ref, o_ref):
    # x_ref: [TM, K]  activation tile   w_ref: [K, TN] bf16 pre-transposed weight
    # b_ref: [1, TN]  bias              o_ref: [TM, TN] output
    x = x_ref[...].astype(jnp.bfloat16)
    acc = jnp.dot(x, w_ref[...], preferred_element_type=jnp.float32)
    o_ref[...] = (acc + b_ref[...].astype(jnp.float32)).astype(o_ref.dtype)


def _flatten_head_kernel_multi_k(x_ref, w_ref, b_ref, o_ref, acc_ref):
    # Same as above but K is split over grid axis 2 with an f32 accumulator.
    k = pl.program_id(2)
    x = x_ref[...].astype(jnp.bfloat16)
    part = jnp.dot(x, w_ref[...], preferred_element_type=jnp.float32)

    @pl.when(k == 0)
    def _():
        acc_ref[...] = part

    @pl.when(k != 0)
    def _():
        acc_ref[...] += part

    @pl.when(k == pl.num_programs(2) - 1)
    def _():
        o_ref[...] = (acc_ref[...] + b_ref[...].astype(jnp.float32)).astype(o_ref.dtype)


def prepare_flatten_head_params(weight, bias):
    """One-time prep of nn.Linear params (hoist out of the per-step path).

    weight: [target_window, nf]  (PyTorch nn.Linear convention, y = x @ W.T + b)
    bias:   [target_window]
    Returns (w_kn, b_row, target_window) with
      w_kn : bf16 [K_pad, T_pad]  pre-transposed + zero-padded weight
      b_row: f32  [1, T_pad]      zero-padded bias row
    """
    target_window, nf = weight.shape
    K_pad = _round_up(nf, 128)
    T_pad = _round_up(target_window, 128)
    w_kn = weight.T.astype(jnp.bfloat16)
    if (K_pad, T_pad) != (nf, target_window):
        w_kn = jnp.pad(w_kn, ((0, K_pad - nf), (0, T_pad - target_window)))
    b_row = bias.astype(jnp.float32)
    if T_pad != target_window:
        b_row = jnp.pad(b_row, (0, T_pad - target_window))
    return w_kn, b_row.reshape(1, T_pad), target_window


def flatten_head_prepared(x, w_kn, b_row, target_window, head_dropout: float = 0.0):
    """x: [bs, n_vars, d_model, patch_num] -> [bs, n_vars, target_window]."""
    bs, n_vars, d_model, patch_num = x.shape
    nf = d_model * patch_num
    M = bs * n_vars
    K_pad, T_pad = w_kn.shape
    assert K_pad == _round_up(nf, 128)
    assert T_pad == _round_up(target_window, 128)

    TM, TN, TK, M_pad = _choose_tiles(M, K_pad, T_pad)
    gm, gn, gk = M_pad // TM, T_pad // TN, K_pad // TK

    # Flatten(start_dim=-2) + collapse leading dims (layout-preserving reshape);
    # pad only if the tile grid requires it (often it does not: nf % 128 == 0,
    # TM is 8-aligned to M).
    x2d = x.reshape(M, nf)
    if (M_pad, K_pad) != (M, nf):
        x2d = jnp.pad(x2d, ((0, M_pad - M), (0, K_pad - nf)))

    out_dtype = x.dtype
    cost = pl.CostEstimate(
        flops=2 * M_pad * K_pad * T_pad,
        bytes_accessed=(
            gn * M_pad * K_pad * x2d.dtype.itemsize        # x re-streamed per N-tile
            + gm * K_pad * T_pad * w_kn.dtype.itemsize     # bf16 weight re-streamed per M-tile
            + M_pad * T_pad * jnp.dtype(out_dtype).itemsize
            + T_pad * 4
        ),
        transcendentals=0,
    )

    if gk == 1:
        # Fast path: whole K in one step -> no accumulator, direct output write.
        out_pad = pl.pallas_call(
            _flatten_head_kernel_single_k,
            out_shape=jax.ShapeDtypeStruct((M_pad, T_pad), out_dtype),
            grid_spec=pltpu.PrefetchScalarGridSpec(
                num_scalar_prefetch=0,
                grid=(gm, gn),
                in_specs=[
                    pl.BlockSpec((TM, TK), lambda i, j: (i, 0)),   # x tile
                    pl.BlockSpec((TK, TN), lambda i, j: (0, j)),   # weight tile [K, N]
                    pl.BlockSpec((1, TN), lambda i, j: (0, j)),    # bias tile
                ],
                out_specs=pl.BlockSpec((TM, TN), lambda i, j: (i, j)),
            ),
            compiler_params=pltpu.CompilerParams(
                dimension_semantics=("parallel", "parallel"),
                vmem_limit_bytes=32 * 1024 * 1024,
            ),
            cost_estimate=cost,
        )(x2d, w_kn, b_row)
    else:
        out_pad = pl.pallas_call(
            _flatten_head_kernel_multi_k,
            out_shape=jax.ShapeDtypeStruct((M_pad, T_pad), out_dtype),
            grid_spec=pltpu.PrefetchScalarGridSpec(
                num_scalar_prefetch=0,
                grid=(gm, gn, gk),
                in_specs=[
                    pl.BlockSpec((TM, TK), lambda i, j, k: (i, k)),
                    pl.BlockSpec((TK, TN), lambda i, j, k: (k, j)),
                    pl.BlockSpec((1, TN), lambda i, j, k: (0, j)),
                ],
                out_specs=pl.BlockSpec((TM, TN), lambda i, j, k: (i, j)),
                scratch_shapes=[pltpu.VMEM((TM, TN), jnp.float32)],
            ),
            compiler_params=pltpu.CompilerParams(
                dimension_semantics=("parallel", "parallel", "arbitrary"),
                vmem_limit_bytes=32 * 1024 * 1024,
            ),
            cost_estimate=cost,
        )(x2d, w_kn, b_row)

    # Dropout: eval-mode / p == 0 is the identity.
    # TODO(synk): training-mode dropout (pltpu.prng_seed + stateful_bernoulli
    # mask in-kernel) not implemented; PatchTST's imputation head uses p = 0 / eval.
    out2d = out_pad[:M, :target_window]
    return out2d.reshape(bs, n_vars, target_window)


def flatten_head(x, weight, bias, head_dropout: float = 0.0):
    """Convenience wrapper taking raw nn.Linear params (prep done per call;
    use prepare_flatten_head_params + flatten_head_prepared to hoist it)."""
    w_kn, b_row, target_window = prepare_flatten_head_params(weight, bias)
    return flatten_head_prepared(x, w_kn, b_row, target_window, head_dropout)


if __name__ == "__main__":
    key = jax.random.PRNGKey(0)
    k_x, k_w, k_b, k_x2, k_w2, k_b2 = jax.random.split(key, 6)

    # --- Case 1: single-K-step fast path (nf = 128 fits one K tile) --------
    bs, n_vars, d_model, patch_num = 2, 4, 16, 8
    nf = d_model * patch_num          # 128
    target_window = 32

    x = jax.random.normal(k_x, (bs, n_vars, d_model, patch_num), dtype=jnp.float32)
    bound = 1.0 / (nf ** 0.5)
    weight = jax.random.uniform(k_w, (target_window, nf), minval=-bound, maxval=bound,
                                dtype=jnp.float32)
    bias = jax.random.uniform(k_b, (target_window,), minval=-bound, maxval=bound,
                              dtype=jnp.float32)

    out = jax.block_until_ready(flatten_head(x, weight, bias, head_dropout=0.0))
    ref = x.reshape(bs, n_vars, nf) @ weight.T + bias
    assert out.shape == (bs, n_vars, target_window)
    assert jnp.allclose(out, ref, atol=3e-2, rtol=3e-2), float(jnp.max(jnp.abs(out - ref)))

    # --- Case 2: multi-K-step path (nf = 3072 -> TK = 1536, 2 K steps) -----
    bs2, n_vars2, d_model2, patch_num2 = 2, 3, 96, 32
    nf2 = d_model2 * patch_num2       # 3072
    tw2 = 24
    x2 = jax.random.normal(k_x2, (bs2, n_vars2, d_model2, patch_num2), dtype=jnp.float32)
    bound2 = 1.0 / (nf2 ** 0.5)
    w2 = jax.random.uniform(k_w2, (tw2, nf2), minval=-bound2, maxval=bound2, dtype=jnp.float32)
    b2 = jax.random.uniform(k_b2, (tw2,), minval=-bound2, maxval=bound2, dtype=jnp.float32)

    out2 = jax.block_until_ready(flatten_head(x2, w2, b2, head_dropout=0.0))
    ref2 = x2.reshape(bs2, n_vars2, nf2) @ w2.T + b2
    assert out2.shape == (bs2, n_vars2, tw2)
    assert jnp.allclose(out2, ref2, atol=3e-2, rtol=3e-2), float(jnp.max(jnp.abs(out2 - ref2)))

    print("KERNEL_OK")
</pallas_src>

<mosaic_0001>
module attributes {stable_mosaic.version = 11 : i64} {
  func.func @_flatten_head_kernel_single_k(%arg0: i32, %arg1: i32, %arg2: memref<8x128xf32, #tpu.memory_space<vmem>>, %arg3: memref<128x128xbf16, #tpu.memory_space<vmem>>, %arg4: memref<1x128xf32, #tpu.memory_space<vmem>>, %arg5: memref<8x128xf32, #tpu.memory_space<vmem>>) attributes {dimension_semantics = [#tpu.dimension_semantics<parallel>, #tpu.dimension_semantics<parallel>], iteration_bounds = array<i64: 1, 1>, scalar_prefetch = 0 : i64, scratch_operands = 0 : i64, tpu.core_type = #tpu.core_type<tc>, window_params = [{transform_indices = @transform_0, window_bounds = array<i64: 8, 128>}, {transform_indices = @transform_1, window_bounds = array<i64: 128, 128>}, {transform_indices = @transform_2, window_bounds = array<i64: 1, 128>}, {transform_indices = @transform_3, window_bounds = array<i64: 8, 128>}]} {
    %c0 = arith.constant 0 : index
    %c0_0 = arith.constant 0 : index
    %0 = vector.load %arg2[%c0, %c0_0] : memref<8x128xf32, #tpu.memory_space<vmem>>, vector<8x128xf32>
    %1 = arith.truncf %0 : vector<8x128xf32> to vector<8x128xbf16>
    %c0_1 = arith.constant 0 : index
    %c0_2 = arith.constant 0 : index
    %2 = vector.load %arg3[%c0_1, %c0_2] : memref<128x128xbf16, #tpu.memory_space<vmem>>, vector<128x128xbf16>
    %cst = arith.constant dense<0.000000e+00> : vector<8x128xf32>
    %3 = tpu.matmul %1, %2, %cst {dimension_numbers = #tpu.dot_dimension_numbers<[1], [0], [0], [1], [0, 0, 1, 1], [], []>} : vector<8x128xbf16>, vector<128x128xbf16>, vector<8x128xf32> -> vector<8x128xf32>
    %c0_3 = arith.constant 0 : index
    %c0_4 = arith.constant 0 : index
    %4 = vector.load %arg4[%c0_3, %c0_4] : memref<1x128xf32, #tpu.memory_space<vmem>>, vector<1x128xf32>
    %5 = vector.broadcast %4 : vector<1x128xf32> to vector<8x128xf32>
    %6 = arith.addf %3, %5 : vector<8x128xf32>
    %c0_5 = arith.constant 0 : index
    %c0_6 = arith.constant 0 : index
    %7 = vector.load %arg5[%c0_5, %c0_6] : memref<8x128xf32, #tpu.memory_space<vmem>>, vector<8x128xf32>
    tpu.vector_store %arg5[%c0_5, %c0_6], %6 {strides = array<i32>} : memref<8x128xf32, #tpu.memory_space<vmem>>, vector<8x128xf32>,
    return
  }
  func.func @transform_0(%arg0: i32, %arg1: i32) -> (i32, i32) {
    %c0_i32 = arith.constant 0 : i32
    %c0_i32_0 = arith.constant 0 : i32
    return %arg0, %c0_i32 : i32, i32
  }
  func.func @transform_1(%arg0: i32, %arg1: i32) -> (i32, i32) {
    %c0_i32 = arith.constant 0 : i32
    %c0_i32_0 = arith.constant 0 : i32
    return %c0_i32, %arg1 : i32, i32
  }
  func.func @transform_2(%arg0: i32, %arg1: i32) -> (i32, i32) {
    %c0_i32 = arith.constant 0 : i32
    %c0_i32_0 = arith.constant 0 : i32
    return %c0_i32, %arg1 : i32, i32
  }
  func.func @transform_3(%arg0: i32, %arg1: i32) -> (i32, i32) {
    %c0_i32 = arith.constant 0 : i32
    return %arg0, %arg1 : i32, i32
  }
}

</mosaic_0001>

<llo_original>
// kernel: tpu_custom_call.1
$region0: #{tpu_custom_call.1}
  #allocation0 [shape = 'u32[]', space=smem, size = 0x4, offset = 0x4, fixed_abs, tag = 'smem constant byte address 0x4 - core index']
  #allocation1 [shape = 'u32[144,128]{1,0:T(1,128)}', space=vmem, size = 0x12000, scoped, tag = 'internal scratch']
  %s0 = inlined_call_operand.hbm [shape: f32[8,128], index: 0, kind: input, shape index: {}]
  %s1 = inlined_call_operand.hbm [shape: bf16[128,128], index: 1, kind: input, shape index: {}]
  %s2 = inlined_call_operand.vmem [shape: f32[1,128], index: 2, kind: input, shape index: {}]
  %s3 = inlined_call_operand.hbm [shape: f32[8,128], index: 3, kind: output, shape index: {}]
  %s4 = sld [smem:[#allocation0]]
  $region30: #{tpu_custom_call.1} parent=0
    _
  %s6 = ssub.s32 1, %s4
  %s7 = scalar_select 0, %s6, %s4
  $region1: #{tpu_custom_call.1} parent=0
    #allocation2 [shape = 'u8[4096]{0}', space=vmem, size = 0x1000, scoped, tag = 'input window, operand 0, single buffered']
    #allocation3 [shape = 's32[1]{0}', space=sflag, size = 0x4, scoped, tag = 'scoped memory for tpu_custom_call.1']
    #allocation4 [shape = 's32[1]{0}', space=sflag, size = 0x4, scoped, tag = 'scoped memory for tpu_custom_call.1']
    #allocation5 [shape = 'u8[32768]{0}', space=vmem, size = 0x8000, scoped, tag = 'input window, operand 1, single buffered']
    #allocation6 [shape = 's32[1]{0}', space=sflag, size = 0x4, scoped, tag = 'scoped memory for tpu_custom_call.1']
    #allocation7 [shape = 'u8[4096]{0}', space=vmem, size = 0x1000, scoped, tag = 'output window, operand 0, single buffered']
    %8 = vsyncpa [#allocation3], 0
    %9 = vsyncpa [#allocation6], 0
    %10 = vsyncpa [#allocation4], 0
    // Predicated region
    $region2: #{tpu_custom_call.1} parent=1 // pred_check
      _
    $region3: #{tpu_custom_call.1} parent=1 // pred_check_branch
      %12 = sbr.rel (0) target = $region5
    $region4: #{tpu_custom_call.1} parent=1 // pred_region
      %s14 = ssub.s32 128, 128
      %15 = vsyncadd [#allocation3], %s14
      %s17 = sshll.u32 [#allocation2], 4
      %s18 = int_to_ptr.vmem [resolvable:$true] %s17
      %20 = dma.hbm_to_vmem [thread:$0]  %s0, 128, %s18, [#allocation3]
    $region5: #{tpu_custom_call.1} parent=1 // pred_fallthru
      _
    // Predicated region
    $region6: #{tpu_custom_call.1} parent=1 // pred_check
      _
    $region7: #{tpu_custom_call.1} parent=1 // pred_check_branch
      %22 = sbr.rel (0) target = $region9
    $region8: #{tpu_custom_call.1} parent=1 // pred_region
      %s24 = ssub.s32 1024, 1024
      %25 = vsyncadd [#allocation6], %s24
      %s26 = sshll.u32 [#allocation5], 4
      %s27 = int_to_ptr.vmem [resolvable:$true] %s26
      %32 = dma.hbm_to_vmem [thread:$0]  %s1, 1024, %s27, [#allocation6], 64, 64, 4
    $region9: #{tpu_custom_call.1} parent=1 // pred_fallthru
      _
    // Predicated region
    $region10: #{tpu_custom_call.1} parent=1 // pred_check
      _
    $region11: #{tpu_custom_call.1} parent=1 // pred_check_branch
      %34 = sbr.rel (0) target = $region13
    $region12: #{tpu_custom_call.1} parent=1 // pred_region
      _
    $region13: #{tpu_custom_call.1} parent=1 // pred_fallthru
      _
    // Predicated region
    $region14: #{tpu_custom_call.1} parent=1 // pred_check
      _
    $region15: #{tpu_custom_call.1} parent=1 // pred_check_branch
      %36 = sbr.rel (0) target = $region17
    $region16: #{tpu_custom_call.1} parent=1 // pred_region
      %37 = dma.done [#allocation3], 128
    $region17: #{tpu_custom_call.1} parent=1 // pred_fallthru
      _
    // Predicated region
    $region18: #{tpu_custom_call.1} parent=1 // pred_check
      _
    $region19: #{tpu_custom_call.1} parent=1 // pred_check_branch
      %39 = sbr.rel (0) target = $region21
    $region20: #{tpu_custom_call.1} parent=1 // pred_region
      %40 = dma.done [#allocation6], 1024
    $region21: #{tpu_custom_call.1} parent=1 // pred_fallthru
      _
    %v42 = vld [vmem:[#allocation2] sm:$0xff]
    %v43 = vpack.c.bf16 %v42, %v42
    %v44 = vld [vmem:[#allocation5] sm:$0xf]
    %v45 = vld [vmem:[#allocation5 + $0x4] sm:$0xf]
    %v46 = vld [vmem:[#allocation5 + $0x8] sm:$0xf]
    %v47 = vld [vmem:[#allocation5 + $0xc] sm:$0xf]
    %v48 = vld [vmem:[#allocation5 + $0x10] sm:$0xf]
    %v49 = vld [vmem:[#allocation5 + $0x14] sm:$0xf]
    %v50 = vld [vmem:[#allocation5 + $0x18] sm:$0xf]
    %v51 = vld [vmem:[#allocation5 + $0x1c] sm:$0xf]
    %v52 = vld [vmem:[#allocation5 + $0x20] sm:$0xf]
    %v53 = vld [vmem:[#allocation5 + $0x24] sm:$0xf]
    %v54 = vld [vmem:[#allocation5 + $0x28] sm:$0xf]
    %v55 = vld [vmem:[#allocation5 + $0x2c] sm:$0xf]
    %v56 = vld [vmem:[#allocation5 + $0x30] sm:$0xf]
    %v57 = vld [vmem:[#allocation5 + $0x34] sm:$0xf]
    %v58 = vld [vmem:[#allocation5 + $0x38] sm:$0xf]
    %v59 = vld [vmem:[#allocation5 + $0x3c] sm:$0xf]
    %v60 = vld [vmem:[%s2] sm:$0x1]
    %v62 = vlaneseq
    %v63 = vshrl.u32 %v62, 7
    %v64 = vsub.s32 0, %v63
    %v65 = vrot.slane %v60, %v64
    %v83 = vunpack.c.l.b16 %v44
    %v84 = vunpack.c.l.b16 %v45
    %v85 = vunpack.c.l.b16 %v46
    %v86 = vunpack.c.l.b16 %v47
    %v87 = vunpack.c.l.b16 %v48
    %v88 = vunpack.c.l.b16 %v49
    %v89 = vunpack.c.l.b16 %v50
    %v90 = vunpack.c.l.b16 %v51
    %v91 = vunpack.c.l.b16 %v52
    %v92 = vunpack.c.l.b16 %v53
    %v93 = vunpack.c.l.b16 %v54
    %v94 = vunpack.c.l.b16 %v55
    %v95 = vunpack.c.l.b16 %v56
    %v96 = vunpack.c.l.b16 %v57
    %v97 = vunpack.c.l.b16 %v58
    %v98 = vunpack.c.l.b16 %v59
    %v99 = vpack.c.b16 %v84, %v83
    %v100 = vpack.c.b16 %v86, %v85
    %v101 = vpack.c.b16 %v88, %v87
    %v102 = vpack.c.b16 %v90, %v89
    %v103 = vpack.c.b16 %v92, %v91
    %v104 = vpack.c.b16 %v94, %v93
    %v105 = vpack.c.b16 %v96, %v95
    %v106 = vpack.c.b16 %v98, %v97
    %115 = vmatprep.subr.bf16.mxu0 0
    %116 = vmatpush1.bf16.msra.mxu0 %v99
    %117 = vmatprep.subr.bf16.mxu0 0
    %118 = vmatpush1.bf16.msra.mxu0 %v100
    %119 = vmatprep.subr.bf16.mxu0 0
    %120 = vmatpush1.bf16.msra.mxu0 %v101
    %121 = vmatprep.subr.bf16.mxu0 0
    %122 = vmatpush1.bf16.msra.mxu0 %v102
    %123 = vmatprep.subr.bf16.mxu0 0
    %124 = vmatpush1.bf16.msra.mxu0 %v103
    %125 = vmatprep.subr.bf16.mxu0 0
    %126 = vmatpush1.bf16.msra.mxu0 %v104
    %127 = vmatprep.subr.bf16.mxu0 0
    %128 = vmatpush1.bf16.msra.mxu0 %v105
    %129 = vmatprep.subr.bf16.mxu0 0
    %130 = vmatpush1.bf16.msra.mxu0 %v106
    %131 = vmatprep.subr.bf16.mxu0 0
    %132 = vmatpush1.bf16.msra.mxu0 0
    %133 = vmatprep.subr.bf16.mxu0 0
    %134 = vmatpush1.bf16.msra.mxu0 0
    %135 = vmatprep.subr.bf16.mxu0 0
    %136 = vmatpush1.bf16.msra.mxu0 0
    %137 = vmatprep.subr.bf16.mxu0 0
    %138 = vmatpush1.bf16.msra.mxu0 0
    %139 = vmatprep.subr.bf16.mxu0 0
    %140 = vmatpush1.bf16.msra.mxu0 0
    %141 = vmatprep.subr.bf16.mxu0 0
    %142 = vmatpush1.bf16.msra.mxu0 0
    %143 = vmatprep.subr.bf16.mxu0 0
    %144 = vmatpush1.bf16.msra.mxu0 0
    %145 = vmatprep.subr.bf16.mxu0 0
    %146 = vmatpush1.bf16.msra.mxu0 0
    %147 = vmatprep.mubr.bf16.mxu0 0
    %148 = vmatmul.mubr.bf16.gmra.mrb[0].mxu0 %v43
    %v149 = vpop.f32.mrb[0].mxu0
    %v150 = vadd.f32 %v65, %v149
    %v151 = vpop.f32.mrb[0].mxu0
    %v152 = vpop.f32.mrb[0].mxu0
    %v153 = vpop.f32.mrb[0].mxu0
    %154 = vdwg.mxu0
    %155 = vst [vmem:[#allocation7] sm:$0xff] %v150
    // Predicated region
    $region22: #{tpu_custom_call.1} parent=1 // pred_check
      _
    $region23: #{tpu_custom_call.1} parent=1 // pred_check_branch
      %157 = sbr.rel (0) target = $region25
    $region24: #{tpu_custom_call.1} parent=1 // pred_region
      %s159 = ssub.s32 128, 128
      %160 = vsyncadd [#allocation4], %s159
      %s162 = sshll.u32 [#allocation7], 4
      %s163 = int_to_ptr.vmem [resolvable:$true] %s162
      %165 = dma.vmem_to_hbm [thread:$0]  %s163, 128, %s3, [#allocation4]
    $region25: #{tpu_custom_call.1} parent=1 // pred_fallthru
      _
    // Predicated region
    $region26: #{tpu_custom_call.1} parent=1 // pred_check
      _
    $region27: #{tpu_custom_call.1} parent=1 // pred_check_branch
      %167 = sbr.rel (0) target = $region29
    $region28: #{tpu_custom_call.1} parent=1 // pred_region
      %168 = dma.done [#allocation4], 128
    $region29: #{tpu_custom_call.1} parent=1 // pred_fallthru
      _
    %169 = vsyncpa [#allocation3], 1
    %170 = vsyncpa [#allocation6], 1
    %171 = vsyncpa [#allocation4], 1

</llo_original>
